<compile_context>
chip_gen: v6e
topology: v6e:2x2x1
jax: 0.10.0
libtpu: 0.0.40
codegen_flags: <defaults>
</compile_context>

<pallas_src>
import functools

import jax
import jax.numpy as jnp
from jax import lax
from jax.experimental import pallas as pl
from jax.experimental.pallas import tpu as pltpu

EPS = 1e-5


# --------------------------------------------------------------------------
# Generation-aware VMEM budgets
# --------------------------------------------------------------------------
def _vmem_capacity_bytes():
    try:
        return int(pltpu.get_tpu_info().vmem_capacity_bytes)
    except Exception:
        return 128 << 20  # conservative default (v5e/v6e class)


def _vmem_target():
    """(physical vmem, scoped-vmem target we size tiles against)."""
    cap = _vmem_capacity_bytes()
    if cap <= (64 << 20):          # v7x-class: 64 MiB per TensorCore
        return cap, 44 << 20
    return cap, 96 << 20           # v5e / v6e: 128 MiB


# --------------------------------------------------------------------------
# Kernels
# --------------------------------------------------------------------------
def _bn_fused_kernel(x_ref, gamma_ref, beta_ref, o_ref, *, inv_count, tc):
    """Single-pass fused BN: x_ref (N, tc, HWp); gamma/beta untiled (1, C, 1)."""
    c = pl.program_id(0)
    start = c * tc
    if tc % 8 == 0:
        start = pl.multiple_of(start, 8)
    g = gamma_ref[0, pl.ds(start, tc), :].astype(jnp.float32)   # (tc, 1)
    bt = beta_ref[0, pl.ds(start, tc), :].astype(jnp.float32)   # (tc, 1)

    n = x_ref.shape[0]
    unroll = n <= 8

    # Stats pass: fp32 sum / sum-of-squares accumulated per batch slice so we
    # never materialize a full-block fp32 temporary.
    def stats_body(i, carry):
        s, ss = carry
        xi = x_ref[i].astype(jnp.float32)                       # (tc, HWp)
        s = s + jnp.sum(xi, axis=1, keepdims=True)
        ss = ss + jnp.sum(xi * xi, axis=1, keepdims=True)
        return s, ss

    zeros = jnp.zeros((tc, 1), jnp.float32)
    s, ss = lax.fori_loop(0, n, stats_body, (zeros, zeros), unroll=unroll)

    mean = s * inv_count
    var = jnp.maximum(ss * inv_count - mean * mean, 0.0)        # clamp cancellation
    inv_std = lax.rsqrt(var + EPS)
    a = g * inv_std                                             # (tc, 1)
    b = bt - mean * a                                           # (tc, 1)
    if o_ref.dtype == jnp.bfloat16:
        a = a.astype(jnp.bfloat16)
        b = b.astype(jnp.bfloat16)

    # Affine pass: y = x * a + b, one batch slice at a time (2 VPU ops/elem).
    @pl.loop(0, n, unroll=unroll)
    def _(i):
        o_ref[i] = (x_ref[i] * a + b).astype(o_ref.dtype)


def _bn_stats_kernel(x_ref, s_ref, ss_ref):
    """Two-pass path, stats call: x_ref (tn, tc, HWp); accumulates per-channel
    sum / sum-of-squares into resident (1, tc, 1) fp32 outputs across the
    'arbitrary' N-block grid axis."""
    @pl.when(pl.program_id(1) == 0)
    def _():
        s_ref[...] = jnp.zeros_like(s_ref)
        ss_ref[...] = jnp.zeros_like(ss_ref)

    tn = x_ref.shape[0]
    tc = x_ref.shape[1]
    unroll = tn <= 8

    def body(i, carry):
        s, ss = carry
        xi = x_ref[i].astype(jnp.float32)                       # (tc, HWp)
        return (s + jnp.sum(xi, axis=1, keepdims=True),
                ss + jnp.sum(xi * xi, axis=1, keepdims=True))

    zeros = jnp.zeros((tc, 1), jnp.float32)
    s, ss = lax.fori_loop(0, tn, body, (zeros, zeros), unroll=unroll)
    s_ref[...] += s.reshape(s_ref.shape)
    ss_ref[...] += ss.reshape(ss_ref.shape)


def _bn_affine_kernel(x_ref, a_ref, b_ref, o_ref, *, tc):
    """Two-pass path, normalize call: y = x * a + b with a/b untiled (1, C, 1)."""
    c = pl.program_id(0)
    start = c * tc
    if tc % 8 == 0:
        start = pl.multiple_of(start, 8)
    a = a_ref[0, pl.ds(start, tc), :]
    b = b_ref[0, pl.ds(start, tc), :]
    if o_ref.dtype == jnp.bfloat16:
        a = a.astype(jnp.bfloat16)
        b = b.astype(jnp.bfloat16)

    tn = x_ref.shape[0]

    @pl.loop(0, tn, unroll=tn <= 8)
    def _(i):
        o_ref[i] = (x_ref[i] * a + b).astype(o_ref.dtype)


# --------------------------------------------------------------------------
# Tile selection
# --------------------------------------------------------------------------
def _select_fused_tc(N, C, HWp, itemsize, vmem_target, vmem_cap):
    """Channel tile for the fused single-pass path; None if no legal tile of the
    full (N, tc, HWp) slab fits the generation's VMEM target."""
    # 2x(in) + 2x(out) double-buffers + ~6 fp32 per-batch-slice temporaries.
    per_tc = 4 * N * HWp * itemsize + 6 * HWp * 4
    budget = vmem_target - (2 << 20)
    if C % 8 != 0:
        # Only a full-C block is layout-legal for the sublane dim.
        return C if C * per_tc <= budget else None
    max_tc = (budget // per_tc // 8) * 8
    if max_tc < 8:
        return None
    tc = min(C, max_tc)
    # v7x (2 TensorCores): keep >= 2 channel blocks so the 'parallel' axis shards.
    if vmem_cap <= (64 << 20) and C >= 16:
        tc = min(tc, max(8, ((C // 2) // 8) * 8))
    while C % tc != 0:   # terminates at 8 (C % 8 == 0 here)
        tc -= 8
    return tc


def _select_twopass_tiles(N, C, HWp, itemsize, vmem_target):
    """(tc, tn) for the two-call path, with tn a divisor of N so the reduction
    grid has no partial blocks."""
    tc = 8 if C % 8 == 0 else C
    budget = vmem_target - (2 << 20) - 6 * tc * HWp * 4
    per_tn = 4 * tc * HWp * itemsize
    max_tn = max(1, budget // per_tn)
    # TODO(synk): if even (1, tc, HWp) exceeds the budget (enormous H*W), an
    # inner HW-chunk pipeline would be needed; not implemented here.
    tn = 1
    for d in range(int(min(N, max_tn)), 0, -1):
        if N % d == 0:
            tn = d
            break
    return tc, tn


# --------------------------------------------------------------------------
# Wrapper
# --------------------------------------------------------------------------
def batchnorm_forward(x_nchw, gamma, beta, *, donate_x=False, _force_two_pass=False):
    """Training-mode BatchNorm forward (num_dims=4), matching the PyTorch
    `batch_norm` training path.  Returns Y only.

    TODO(synk): moving_mean / moving_var running-stat updates are computed but
    never persisted by the PyTorch module's forward, so they are omitted here.
    """
    N, C, H, W = x_nchw.shape
    HW = H * W
    dtype = x_nchw.dtype
    itemsize = jnp.dtype(dtype).itemsize

    # Lane-dense last dim: pad H*W to a multiple of 128 when needed so stores
    # are unmasked full-lane vst.  Padded zeros add nothing to the sums; we
    # divide by the true count and slice the pad off at the end.
    HWp = HW if HW % 128 == 0 else ((HW + 127) // 128) * 128
    x3 = x_nchw.reshape(N, C, HW)                  # metadata-only, no transpose
    if HWp != HW:
        x3 = jnp.pad(x3, ((0, 0), (0, 0), (0, HWp - HW)))

    g3 = gamma.reshape(1, C, 1).astype(jnp.float32)
    beta3 = beta.reshape(1, C, 1).astype(jnp.float32)

    vmem_cap, vmem_target = _vmem_target()
    inv_count = 1.0 / float(N * HW)

    tc = None if _force_two_pass else _select_fused_tc(N, C, HWp, itemsize,
                                                       vmem_target, vmem_cap)

    if tc is not None:
        # ---- Path A: fused single pass (1 HBM read + 1 HBM write) ----------
        blk = N * tc * HWp * itemsize
        vmem_limit = int(min(max(4 * blk + 6 * tc * HWp * 4 + (2 << 20), 8 << 20),
                             vmem_target))
        kernel = functools.partial(_bn_fused_kernel, inv_count=inv_count, tc=tc)
        io_alias = {0: 0} if (donate_x and HWp == HW) else {}
        y3 = pl.pallas_call(
            kernel,
            out_shape=jax.ShapeDtypeStruct((N, C, HWp), dtype),
            grid=(C // tc,),
            in_specs=[
                pl.BlockSpec((N, tc, HWp), lambda c: (0, c, 0)),
                pl.BlockSpec((1, C, 1), lambda c: (0, 0, 0)),   # gamma, untiled
                pl.BlockSpec((1, C, 1), lambda c: (0, 0, 0)),   # beta, untiled
            ],
            out_specs=pl.BlockSpec((N, tc, HWp), lambda c: (0, c, 0)),
            input_output_aliases=io_alias,
            compiler_params=pltpu.CompilerParams(
                dimension_semantics=("parallel",),
                vmem_limit_bytes=vmem_limit,
            ),
        )(x3, g3, beta3)
    else:
        # ---- Path B: slab too large for VMEM -> stats kernel + affine kernel
        tc2, tn = _select_twopass_tiles(N, C, HWp, itemsize, vmem_target)
        cblocks = C // tc2
        nblocks = N // tn
        blk = tn * tc2 * HWp * itemsize
        stats_vmem = int(min(max(2 * blk + 8 * tc2 * HWp * 4 + (2 << 20), 8 << 20),
                             vmem_target))
        affine_vmem = int(min(max(4 * blk + 6 * tc2 * HWp * 4 + (2 << 20), 8 << 20),
                              vmem_target))

        s, ss = pl.pallas_call(
            _bn_stats_kernel,
            out_shape=(jax.ShapeDtypeStruct((1, C, 1), jnp.float32),
                       jax.ShapeDtypeStruct((1, C, 1), jnp.float32)),
            grid=(cblocks, nblocks),
            in_specs=[pl.BlockSpec((tn, tc2, HWp), lambda c, n: (n, c, 0))],
            out_specs=(pl.BlockSpec((1, tc2, 1), lambda c, n: (0, c, 0)),
                       pl.BlockSpec((1, tc2, 1), lambda c, n: (0, c, 0))),
            compiler_params=pltpu.CompilerParams(
                dimension_semantics=("parallel", "arbitrary"),
                vmem_limit_bytes=stats_vmem,
            ),
        )(x3)

        # Tiny (C,) fp32 finalize in plain XLA (uses the true, unpadded count).
        mean = s * inv_count
        var = jnp.maximum(ss * inv_count - mean * mean, 0.0)
        inv_std = lax.rsqrt(var + EPS)
        a = g3 * inv_std                      # (1, C, 1)
        shift = beta3 - mean * a              # (1, C, 1)

        kernel = functools.partial(_bn_affine_kernel, tc=tc2)
        y3 = pl.pallas_call(
            kernel,
            out_shape=jax.ShapeDtypeStruct((N, C, HWp), dtype),
            grid=(cblocks, nblocks),
            in_specs=[
                pl.BlockSpec((tn, tc2, HWp), lambda c, n: (n, c, 0)),
                pl.BlockSpec((1, C, 1), lambda c, n: (0, 0, 0)),   # a, untiled
                pl.BlockSpec((1, C, 1), lambda c, n: (0, 0, 0)),   # shift, untiled
            ],
            out_specs=pl.BlockSpec((tn, tc2, HWp), lambda c, n: (n, c, 0)),
            compiler_params=pltpu.CompilerParams(
                dimension_semantics=("parallel", "parallel"),
                vmem_limit_bytes=affine_vmem,
            ),
        )(x3, a, shift)

    if HWp != HW:
        y3 = y3[:, :, :HW]
    return y3.reshape(N, C, H, W)


# --------------------------------------------------------------------------
# Reference + test
# --------------------------------------------------------------------------
def _reference(x, gamma, beta):
    mean = jnp.mean(x, axis=(0, 2, 3), keepdims=True)
    var = jnp.mean((x - mean) ** 2, axis=(0, 2, 3), keepdims=True)
    x_hat = (x - mean) / jnp.sqrt(var + EPS)
    return gamma * x_hat + beta


if __name__ == "__main__":
    key = jax.random.PRNGKey(0)
    N, C, H, W = 2, 4, 16, 16
    x = jax.random.normal(key, (N, C, H, W), dtype=jnp.float32)

    # Deterministic parameter init, matching BatchNorm.__init__ (num_dims=4)
    gamma = jnp.ones((1, C, 1, 1), dtype=jnp.float32)
    beta = jnp.zeros((1, C, 1, 1), dtype=jnp.float32)

    y_ref = _reference(x, gamma, beta)

    # Fused single-pass path (used whenever the per-channel slab fits VMEM).
    y = jax.block_until_ready(batchnorm_forward(x, gamma, beta))
    assert y.shape == (N, C, H, W)
    assert jnp.allclose(y, y_ref, atol=1e-5, rtol=1e-5)

    # Two-call fallback path (used for large N*H*W); force it here to validate.
    y2 = jax.block_until_ready(batchnorm_forward(x, gamma, beta, _force_two_pass=True))
    assert jnp.allclose(y2, y_ref, atol=1e-5, rtol=1e-5)

    print("KERNEL_OK")
</pallas_src>

<mosaic_0001>
module attributes {stable_mosaic.version = 11 : i64} {
  func.func @_bn_fused_kernel(%arg0: i32, %arg1: memref<2x4x256xf32, #tpu.memory_space<vmem>>, %arg2: memref<1x4x1xf32, #tpu.memory_space<vmem>>, %arg3: memref<1x4x1xf32, #tpu.memory_space<vmem>>, %arg4: memref<2x4x256xf32, #tpu.memory_space<vmem>>) attributes {dimension_semantics = [#tpu.dimension_semantics<parallel>], iteration_bounds = array<i64: 1>, scalar_prefetch = 0 : i64, scratch_operands = 0 : i64, tpu.core_type = #tpu.core_type<tc>, window_params = [{transform_indices = @transform_0, window_bounds = array<i64: 2, 4, 256>}, {pipeline_mode = #tpu.pipeline_mode<synchronous>, transform_indices = @transform_1, window_bounds = array<i64: 1, 4, 1>}, {pipeline_mode = #tpu.pipeline_mode<synchronous>, transform_indices = @transform_2, window_bounds = array<i64: 1, 4, 1>}, {transform_indices = @transform_3, window_bounds = array<i64: 2, 4, 256>}]} {
    %c4_i32 = arith.constant 4 : i32
    %0 = arith.muli %arg0, %c4_i32 : i32
    %c0 = arith.constant 0 : index
    %1 = arith.index_cast %0 : i32 to index
    %c0_0 = arith.constant 0 : index
    %2 = vector.load %arg2[%c0, %1, %c0_0] : memref<1x4x1xf32, #tpu.memory_space<vmem>>, vector<1x4x1xf32>
    %3 = vector.shape_cast %2 : vector<1x4x1xf32> to vector<4x1xf32>
    %c0_1 = arith.constant 0 : index
    %4 = arith.index_cast %0 : i32 to index
    %c0_2 = arith.constant 0 : index
    %5 = vector.load %arg3[%c0_1, %4, %c0_2] : memref<1x4x1xf32, #tpu.memory_space<vmem>>, vector<1x4x1xf32>
    %6 = vector.shape_cast %5 : vector<1x4x1xf32> to vector<4x1xf32>
    %cst = arith.constant 0.000000e+00 : f32
    %7 = vector.broadcast %cst : f32 to vector<4x1xf32>
    %c0_i32 = arith.constant 0 : i32
    %8 = arith.index_cast %c0_i32 : i32 to index
    %c0_3 = arith.constant 0 : index
    %c0_4 = arith.constant 0 : index
    %9 = vector.load %arg1[%8, %c0_3, %c0_4] : memref<2x4x256xf32, #tpu.memory_space<vmem>>, vector<1x4x256xf32>
    %10 = vector.shape_cast %9 : vector<1x4x256xf32> to vector<4x256xf32>
    %cst_5 = arith.constant dense<0.000000e+00> : vector<4xf32>
    %11 = vector.multi_reduction <add>, %10, %cst_5 [1] : vector<4x256xf32> to vector<4xf32>
    %12 = vector.shape_cast %11 : vector<4xf32> to vector<4x1xf32>
    %13 = arith.addf %7, %12 : vector<4x1xf32>
    %14 = arith.mulf %10, %10 : vector<4x256xf32>
    %cst_6 = arith.constant dense<0.000000e+00> : vector<4xf32>
    %15 = vector.multi_reduction <add>, %14, %cst_6 [1] : vector<4x256xf32> to vector<4xf32>
    %16 = vector.shape_cast %15 : vector<4xf32> to vector<4x1xf32>
    %17 = arith.addf %7, %16 : vector<4x1xf32>
    %c1_i32 = arith.constant 1 : i32
    %18 = arith.index_cast %c1_i32 : i32 to index
    %c0_7 = arith.constant 0 : index
    %c0_8 = arith.constant 0 : index
    %19 = vector.load %arg1[%18, %c0_7, %c0_8] : memref<2x4x256xf32, #tpu.memory_space<vmem>>, vector<1x4x256xf32>
    %20 = vector.shape_cast %19 : vector<1x4x256xf32> to vector<4x256xf32>
    %cst_9 = arith.constant dense<0.000000e+00> : vector<4xf32>
    %21 = vector.multi_reduction <add>, %20, %cst_9 [1] : vector<4x256xf32> to vector<4xf32>
    %22 = vector.shape_cast %21 : vector<4xf32> to vector<4x1xf32>
    %23 = arith.addf %13, %22 : vector<4x1xf32>
    %24 = arith.mulf %20, %20 : vector<4x256xf32>
    %cst_10 = arith.constant dense<0.000000e+00> : vector<4xf32>
    %25 = vector.multi_reduction <add>, %24, %cst_10 [1] : vector<4x256xf32> to vector<4xf32>
    %26 = vector.shape_cast %25 : vector<4xf32> to vector<4x1xf32>
    %27 = arith.addf %17, %26 : vector<4x1xf32>
    %c2_i32 = arith.constant 2 : i32
    %cst_11 = arith.constant 0.001953125 : f32
    %28 = vector.broadcast %cst_11 : f32 to vector<4x1xf32>
    %29 = arith.mulf %23, %28 : vector<4x1xf32>
    %cst_12 = arith.constant 0.001953125 : f32
    %30 = vector.broadcast %cst_12 : f32 to vector<4x1xf32>
    %31 = arith.mulf %27, %30 : vector<4x1xf32>
    %32 = arith.mulf %29, %29 : vector<4x1xf32>
    %33 = arith.subf %31, %32 : vector<4x1xf32>
    %cst_13 = arith.constant 0.000000e+00 : f32
    %34 = vector.broadcast %cst_13 : f32 to vector<4x1xf32>
    %35 = arith.maximumf %33, %34 : vector<4x1xf32>
    %cst_14 = arith.constant 9.99999974E-6 : f32
    %36 = vector.broadcast %cst_14 : f32 to vector<4x1xf32>
    %37 = arith.addf %35, %36 : vector<4x1xf32>
    %38 = math.rsqrt %37 : vector<4x1xf32>
    %39 = arith.mulf %3, %38 : vector<4x1xf32>
    %40 = arith.mulf %29, %39 : vector<4x1xf32>
    %41 = arith.subf %6, %40 : vector<4x1xf32>
    %c0_i32_15 = arith.constant 0 : i32
    %c1_i32_16 = arith.constant 1 : i32
    %42 = arith.muli %c0_i32_15, %c1_i32_16 : i32
    %c0_i32_17 = arith.constant 0 : i32
    %43 = arith.addi %c0_i32_17, %42 : i32
    %44 = arith.index_cast %43 : i32 to index
    %c0_18 = arith.constant 0 : index
    %c0_19 = arith.constant 0 : index
    %45 = vector.load %arg1[%44, %c0_18, %c0_19] : memref<2x4x256xf32, #tpu.memory_space<vmem>>, vector<1x4x256xf32>
    %46 = vector.shape_cast %45 : vector<1x4x256xf32> to vector<4x256xf32>
    %47 = vector.broadcast %39 : vector<4x1xf32> to vector<4x256xf32>
    %48 = arith.mulf %46, %47 : vector<4x256xf32>
    %49 = vector.broadcast %41 : vector<4x1xf32> to vector<4x256xf32>
    %50 = arith.addf %48, %49 : vector<4x256xf32>
    %51 = arith.index_cast %43 : i32 to index
    %c0_20 = arith.constant 0 : index
    %c0_21 = arith.constant 0 : index
    %52 = vector.load %arg4[%51, %c0_20, %c0_21] : memref<2x4x256xf32, #tpu.memory_space<vmem>>, vector<1x4x256xf32>
    %53 = vector.shape_cast %52 : vector<1x4x256xf32> to vector<4x256xf32>
    %54 = vector.shape_cast %50 : vector<4x256xf32> to vector<1x4x256xf32>
    tpu.vector_store %arg4[%51, %c0_20, %c0_21], %54 {strides = array<i32>} : memref<2x4x256xf32, #tpu.memory_space<vmem>>, vector<1x4x256xf32>,
    %c1_i32_22 = arith.constant 1 : i32
    %c1_i32_23 = arith.constant 1 : i32
    %55 = arith.muli %c1_i32_22, %c1_i32_23 : i32
    %c0_i32_24 = arith.constant 0 : i32
    %56 = arith.addi %c0_i32_24, %55 : i32
    %57 = arith.index_cast %56 : i32 to index
    %c0_25 = arith.constant 0 : index
    %c0_26 = arith.constant 0 : index
    %58 = vector.load %arg1[%57, %c0_25, %c0_26] : memref<2x4x256xf32, #tpu.memory_space<vmem>>, vector<1x4x256xf32>
    %59 = vector.shape_cast %58 : vector<1x4x256xf32> to vector<4x256xf32>
    %60 = vector.broadcast %39 : vector<4x1xf32> to vector<4x256xf32>
    %61 = arith.mulf %59, %60 : vector<4x256xf32>
    %62 = vector.broadcast %41 : vector<4x1xf32> to vector<4x256xf32>
    %63 = arith.addf %61, %62 : vector<4x256xf32>
    %64 = arith.index_cast %56 : i32 to index
    %c0_27 = arith.constant 0 : index
    %c0_28 = arith.constant 0 : index
    %65 = vector.load %arg4[%64, %c0_27, %c0_28] : memref<2x4x256xf32, #tpu.memory_space<vmem>>, vector<1x4x256xf32>
    %66 = vector.shape_cast %65 : vector<1x4x256xf32> to vector<4x256xf32>
    %67 = vector.shape_cast %63 : vector<4x256xf32> to vector<1x4x256xf32>
    tpu.vector_store %arg4[%64, %c0_27, %c0_28], %67 {strides = array<i32>} : memref<2x4x256xf32, #tpu.memory_space<vmem>>, vector<1x4x256xf32>,
    %c2_i32_29 = arith.constant 2 : i32
    return
  }
  func.func @transform_0(%arg0: i32) -> (i32, i32, i32) {
    %c0_i32 = arith.constant 0 : i32
    %c0_i32_0 = arith.constant 0 : i32
    %c0_i32_1 = arith.constant 0 : i32
    return %c0_i32, %arg0, %c0_i32_0 : i32, i32, i32
  }
  func.func @transform_1(%arg0: i32) -> (i32, i32, i32) {
    %c0_i32 = arith.constant 0 : i32
    %c0_i32_0 = arith.constant 0 : i32
    %c0_i32_1 = arith.constant 0 : i32
    %c0_i32_2 = arith.constant 0 : i32
    return %c0_i32, %c0_i32_0, %c0_i32_1 : i32, i32, i32
  }
  func.func @transform_2(%arg0: i32) -> (i32, i32, i32) {
    %c0_i32 = arith.constant 0 : i32
    %c0_i32_0 = arith.constant 0 : i32
    %c0_i32_1 = arith.constant 0 : i32
    %c0_i32_2 = arith.constant 0 : i32
    return %c0_i32, %c0_i32_0, %c0_i32_1 : i32, i32, i32
  }
  func.func @transform_3(%arg0: i32) -> (i32, i32, i32) {
    %c0_i32 = arith.constant 0 : i32
    %c0_i32_0 = arith.constant 0 : i32
    %c0_i32_1 = arith.constant 0 : i32
    return %c0_i32, %arg0, %c0_i32_0 : i32, i32, i32
  }
}

</mosaic_0001>

<llo_original>
// kernel: tpu_custom_call.1
$region0: #{tpu_custom_call.1}
  #allocation0 [shape = 'u32[]', space=smem, size = 0x4, offset = 0x4, fixed_abs, tag = 'smem constant byte address 0x4 - core index']
  #allocation1 [shape = 'u32[144,128]{1,0:T(1,128)}', space=vmem, size = 0x12000, scoped, tag = 'internal scratch']
  %s0 = inlined_call_operand.hbm [shape: f32[2,4,256], index: 0, kind: input, shape index: {}]
  %s1 = inlined_call_operand.vmem [shape: f32[1,4,1], index: 1, kind: input, shape index: {}]
  %s2 = inlined_call_operand.vmem [shape: f32[1,4,1], index: 2, kind: input, shape index: {}]
  %s3 = inlined_call_operand.hbm [shape: f32[2,4,256], index: 3, kind: output, shape index: {}]
  %s4 = sld [smem:[#allocation0]]
  $region26: #{tpu_custom_call.1} parent=0
    _
  %s6 = ssub.s32 1, %s4
  %s7 = scalar_select 0, %s6, %s4
  $region1: #{tpu_custom_call.1} parent=0
    #allocation2 [shape = 'u8[8192]{0}', space=vmem, size = 0x2000, scoped, tag = 'input window, operand 0, single buffered']
    #allocation3 [shape = 's32[1]{0}', space=sflag, size = 0x4, scoped, tag = 'scoped memory for tpu_custom_call.1']
    #allocation4 [shape = 's32[1]{0}', space=sflag, size = 0x4, scoped, tag = 'scoped memory for tpu_custom_call.1']
    #allocation5 [shape = 'u8[8192]{0}', space=vmem, size = 0x2000, scoped, tag = 'output window, operand 0, single buffered']
    %8 = vsyncpa [#allocation3], 0
    %9 = vsyncpa [#allocation4], 0
    // Predicated region
    $region2: #{tpu_custom_call.1} parent=1 // pred_check
      _
    $region3: #{tpu_custom_call.1} parent=1 // pred_check_branch
      %11 = sbr.rel (0) target = $region5
    $region4: #{tpu_custom_call.1} parent=1 // pred_region
      %s13 = ssub.s32 256, 256
      %14 = vsyncadd [#allocation3], %s13
      %s15 = sshll.u32 [#allocation2], 4
      %s16 = int_to_ptr.vmem [resolvable:$true] %s15
      %21 = dma.hbm_to_vmem [thread:$0]  %s0, 256, %s16, [#allocation3], 128, 128, 8
    $region5: #{tpu_custom_call.1} parent=1 // pred_fallthru
      _
    // Predicated region
    $region6: #{tpu_custom_call.1} parent=1 // pred_check
      _
    $region7: #{tpu_custom_call.1} parent=1 // pred_check_branch
      %23 = sbr.rel (0) target = $region9
    $region8: #{tpu_custom_call.1} parent=1 // pred_region
      _
    $region9: #{tpu_custom_call.1} parent=1 // pred_fallthru
      _
    // Predicated region
    $region10: #{tpu_custom_call.1} parent=1 // pred_check
      _
    $region11: #{tpu_custom_call.1} parent=1 // pred_check_branch
      %25 = sbr.rel (0) target = $region13
    $region12: #{tpu_custom_call.1} parent=1 // pred_region
      _
    $region13: #{tpu_custom_call.1} parent=1 // pred_fallthru
      _
    // Predicated region
    $region14: #{tpu_custom_call.1} parent=1 // pred_check
      _
    $region15: #{tpu_custom_call.1} parent=1 // pred_check_branch
      %27 = sbr.rel (0) target = $region17
    $region16: #{tpu_custom_call.1} parent=1 // pred_region
      %28 = dma.done [#allocation3], 256
    $region17: #{tpu_custom_call.1} parent=1 // pred_fallthru
      _
    %s29 = smul.u32 0, 4
    %s30 = scalar_lea.vmem %s1, %s29
    %v31 = vld [vmem:[%s30] sm:$0xf]
    %s32 = scalar_lea.vmem %s2, %s29
    %v33 = vld [vmem:[%s32] sm:$0xf]
    %v34 = vld [vmem:[#allocation2] sm:$0xff]
    %v36 = vcombine.high %v34, %v34
    %vm38 = vcmask 1043456
    %v39 = vsel %vm38, %v34, 0.0
    %v40 = vsel %vm38, %v36, 0.0
    %v41 = vadd.f32 %v39, %v40
    %42 = vadd.xlane.f32.xlu0 %v41
    %v43 = vpop.xlane.xlu0 %42
    %v44 = vadd.f32 %v43, 0.0
    %v45 = vmul.f32 %v34, %v34
    %v47 = vcombine.high %v45, %v45
    %v49 = vsel %vm38, %v45, 0.0
    %v50 = vsel %vm38, %v47, 0.0
    %v51 = vadd.f32 %v49, %v50
    %52 = vadd.xlane.f32.xlu0 %v51
    %v53 = vpop.xlane.xlu0 %52
    %v54 = vadd.f32 %v53, 0.0
    %s55 = scalar_lea.vmem [#allocation2], 8
    %v56 = vld [vmem:[%s55] sm:$0xff]
    %v58 = vcombine.high %v56, %v56
    %v60 = vsel %vm38, %v56, 0.0
    %v61 = vsel %vm38, %v58, 0.0
    %v62 = vadd.f32 %v60, %v61
    %63 = vadd.xlane.f32.xlu0 %v62
    %v64 = vpop.xlane.xlu0 %63
    %v65 = vadd.f32 %v44, %v64
    %v66 = vmul.f32 %v56, %v56
    %v68 = vcombine.high %v66, %v66
    %v70 = vsel %vm38, %v66, 0.0
    %v71 = vsel %vm38, %v68, 0.0
    %v72 = vadd.f32 %v70, %v71
    %73 = vadd.xlane.f32.xlu0 %v72
    %v74 = vpop.xlane.xlu0 %73
    %v75 = vadd.f32 %v54, %v74
    %v76 = vmul.f32 %v65, 0.001953125
    %v77 = vmul.f32 %v75, 0.001953125
    %v78 = vmul.f32 %v76, %v76
    %v79 = vsub.f32 %v77, %v78
    %v80 = vmax.f32 %v79, 0.0
    %v81 = vadd.f32 %v80, 1e-05
    %v82 = vrsqrt.pop %v81
    %v83 = vmul.f32 %v31, %v82
    %v84 = vmul.f32 %v76, %v83
    %v85 = vsub.f32 %v33, %v84
    %87 = vset.pattern.permute.xlu0 0
    %88 = vperm.xlu0 %87, %v83
    %v89 = vpop.permute.xlu0 %88
    %v91 = vunpack.c.l.s4 839922192
    %v92 = vunpack.c.0.s8 %v91
    %v93 = vlaneseq
    %v94 = vshrl.u32 %v93, 7
    %v95 = vsub.s32 %v92, %v94
    %v96 = vrot.slane %v89, %v95
    %v98 = vmul.f32 %v34, %v96
    %100 = vset.pattern.permute.xlu0 0
    %101 = vperm.xlu0 %100, %v85
    %v102 = vpop.permute.xlu0 %101
    %v104 = vunpack.c.l.s4 839922192
    %v105 = vunpack.c.0.s8 %v104
    %v106 = vlaneseq
    %v107 = vshrl.u32 %v106, 7
    %v108 = vsub.s32 %v105, %v107
    %v109 = vrot.slane %v102, %v108
    %v111 = vadd.f32 %v98, %v109
    %112 = vst [vmem:[#allocation5] sm:$0xff] %v111
    %v113 = vld [vmem:[%s55] sm:$0xff]
    %v114 = vmul.f32 %v113, %v96
    %v115 = vadd.f32 %v114, %v109
    %s116 = scalar_lea.vmem [#allocation5], 8
    %117 = vst [vmem:[%s116] sm:$0xff] %v115
    // Predicated region
    $region18: #{tpu_custom_call.1} parent=1 // pred_check
      _
    $region19: #{tpu_custom_call.1} parent=1 // pred_check_branch
      %119 = sbr.rel (0) target = $region21
    $region20: #{tpu_custom_call.1} parent=1 // pred_region
      %s121 = ssub.s32 256, 256
      %122 = vsyncadd [#allocation4], %s121
      %s123 = sshll.u32 [#allocation5], 4
      %s124 = int_to_ptr.vmem [resolvable:$true] %s123
      %129 = dma.vmem_to_hbm [thread:$0]  %s124, 256, %s3, [#allocation4], 128, 128, 8
    $region21: #{tpu_custom_call.1} parent=1 // pred_fallthru
      _
    // Predicated region
    $region22: #{tpu_custom_call.1} parent=1 // pred_check
      _
    $region23: #{tpu_custom_call.1} parent=1 // pred_check_branch
      %131 = sbr.rel (0) target = $region25
    $region24: #{tpu_custom_call.1} parent=1 // pred_region
      %132 = dma.done [#allocation4], 256
    $region25: #{tpu_custom_call.1} parent=1 // pred_fallthru
      _
    %133 = vsyncpa [#allocation3], 1
    %134 = vsyncpa [#allocation4], 1

</llo_original>
